<compile_context>
chip_gen: v5e
topology: v5e:2x2
jax: 0.10.0
libtpu: 0.0.40
codegen_flags: <defaults>
</compile_context>

<pallas_src>
import functools
import math

import jax
import jax.numpy as jnp
from jax.experimental import pallas as pl
from jax.experimental.pallas import tpu as pltpu

# ----------------------------- configuration -------------------------------
VOCAB = 32
N_SPK = 4
HID = 32
FFN = 64
N_MELS = 16
UPSAMPLE = 4            # total vocoder upsampling (2 x 2)
HEADS = 3               # fused width-1 heads: [f0 | energy | dur]
HEADS_PAD = 8           # heads padded to 8 output lanes
VAR_PAD = 8             # [f0, energy] variance input padded to 8 lanes inside the kernel
PHASES = 4              # audio samples per mel frame in the phase-major vocoder layout


# ------------------------------ small helpers ------------------------------
def _lrelu(x):
    return jnp.where(x > 0, x, 0.1 * x)


def _bf(x):
    return x.astype(jnp.bfloat16)


def _row_mask(val, lo, hi):
    """Zero all rows whose (sublane) index is outside [lo, hi). Emulates zero padding."""
    r = jax.lax.broadcasted_iota(jnp.int32, val.shape, 0)
    return jnp.where((r >= lo) & (r < hi), val, 0.0)


def _im2col(x, K):
    """x: (L, C) -> (L-K+1, K*C): K shifted slices concatenated on the lane axis."""
    Lo = x.shape[0] - K + 1
    return jnp.concatenate([x[k:k + Lo, :] for k in range(K)], axis=-1)


def _zpad_rows(x, lo, hi):
    """In-kernel 'same'-conv halo: prepend/append zero rows to a (L, C) array."""
    z_lo = jnp.zeros((lo, x.shape[1]), x.dtype)
    z_hi = jnp.zeros((hi, x.shape[1]), x.dtype)
    return jnp.concatenate([z_lo, x, z_hi], axis=0)


def _phase_ctx(x):
    """x: (T, P*C) phase-major.  Returns (T, 3*P*C) = [prev row | cur | next], zero outside."""
    C = x.shape[1]
    z = jnp.zeros((1, C), x.dtype)
    prev = jnp.concatenate([z, x[:-1, :]], axis=0)
    nxt = jnp.concatenate([x[1:, :], z], axis=0)
    return jnp.concatenate([prev, x, nxt], axis=-1)


def _slab(slab_ref, offs, name):
    """Static slice of one packed weight / bias row block out of the per-kernel slab."""
    r0, h, w = offs[name]
    return slab_ref[r0:r0 + h, 0:w]


def _dot(a, w):
    return jnp.dot(_bf(a), w, preferred_element_type=jnp.float32)


# ------------------------------ fused kernels ------------------------------
def _encoder_kernel(x_ref, slab_ref, out_ref, *, offs):
    """Encoder FFN (+ residual) and the batched [f0|energy|dur] heads -> (Tph, HID+8)."""
    g = functools.partial(_slab, slab_ref, offs)
    x = x_ref[0]                                                       # (Tph, HID) f32
    h = jnp.maximum(_dot(x, g("enc_w1")) + g("enc_b1"), 0.0)
    enc = _dot(h, g("enc_w2")) + g("enc_b2") + x
    heads = _dot(enc, g("heads_w")) + g("heads_b")                     # (Tph, 8)
    out_ref[0] = jnp.concatenate([enc, heads], axis=-1)                # (Tph, HID + 8)


def _synth_kernel(rep_ref, var_ref, slab_ref, melb_ref, mela_ref, audio_ref, *, offs):
    """Decoder FFN + postnet + full HiFiGAN generator, fused.  All activations stay in VMEM."""
    g = functools.partial(_slab, slab_ref, offs)
    rep = rep_ref[0]                                                   # (Tm, HID + 8)
    Tm = rep.shape[0]
    fr = rep[:, 0:HID]                                                 # regulated encoder frames

    # ---- variance embedding + decoder FFN (+ residual) + mel projection ----
    var8 = jnp.concatenate(
        [var_ref[0], jnp.zeros((Tm, VAR_PAD - 2), jnp.float32)], axis=-1)      # (Tm, 8)
    dec_in = fr + _dot(var8, g("ve_w")) + g("ve_b")
    h = jnp.maximum(_dot(dec_in, g("dec_w1")) + g("dec_b1"), 0.0)
    dec = _dot(h, g("dec_w2")) + g("dec_b2") + dec_in
    mel_before = _dot(dec, g("mel_w")) + g("mel_b")                    # (Tm, n_mels)

    # ---- postnet: two K=5 'same' convs + residual (halo + mask = zero padding) ----
    bm = _zpad_rows(mel_before, 4, 4)                                  # (Tm+8, 16)
    c1 = jnp.tanh(_dot(_im2col(bm, 5), g("post_w1")) + g("post_b1"))   # (Tm+4, 16)
    c1 = _row_mask(c1, 2, 2 + Tm)
    c2 = _dot(_im2col(c1, 5), g("post_w2")) + g("post_b2")             # (Tm, 16)
    mel_after = mel_before + c2

    # ---- HiFiGAN generator: pre conv (K=7 'same') ----
    pm = _zpad_rows(mel_after, 3, 3)                                   # (Tm+6, 16)
    pre = _lrelu(_dot(_im2col(pm, 7), g("g_pre_w")) + g("g_pre_b"))    # (Tm, 32)

    # ---- x2 upsample #1: polyphase matmul, phase-major output [even16 | odd16] ----
    pre_nx = jnp.concatenate([pre[1:, :], jnp.zeros((1, 32), jnp.float32)], axis=0)
    h1 = _lrelu(_dot(jnp.concatenate([pre, pre_nx], axis=-1), g("up1_w")) + g("up1_b"))

    # ---- x2 upsample #2: consumes the phase-major layout directly -> 4 phases x 8 ch ----
    e_nx = jnp.concatenate([h1[1:, 0:16], jnp.zeros((1, 16), jnp.float32)], axis=0)
    h2 = _lrelu(_dot(jnp.concatenate([h1, e_nx], axis=-1), g("up2_w")) + g("up2_b"))

    # ---- residual block (two K=3 'same' convs) in phase-major layout ----
    r1 = _lrelu(_dot(_phase_ctx(h2), g("res_w1")) + g("res_b1"))
    r2 = _dot(_phase_ctx(r1), g("res_w2")) + g("res_b2")
    hres = h2 + r2

    # ---- post conv (K=7 'same', 8 -> 1 ch) -> 4 audio samples (phases) per mel frame ----
    audio = jnp.tanh(_dot(_phase_ctx(hres), g("g_post_w")) + g("g_post_b"))     # (Tm, 4)

    melb_ref[0] = mel_before
    mela_ref[0] = mel_after
    audio_ref[0] = audio


def _disc_kernel(pa_ref, ga_ref, slab_ref, out_ref, *, offs):
    """3-layer conv discriminator; grid axis 0 selects predicted vs ground-truth audio."""
    g = functools.partial(_slab, slab_ref, offs)
    a = jnp.where(pl.program_id(0) == 0, pa_ref[0], ga_ref[0])         # (Ta, 1) f32
    Ta = a.shape[0]

    ap = _zpad_rows(a, 2, 2)                                           # (Ta+4, 1)
    w1 = g("d_w1")                                                     # (5, 8)
    acc = jnp.zeros((Ta, 8), jnp.float32) + g("d_b1")
    for k in range(5):                       # Cin == 1 -> broadcast-multiply taps
        acc = acc + ap[k:k + Ta, :] * w1[k:k + 1, :]
    f1 = _lrelu(acc)                                                   # (Ta, 8)

    f2 = _lrelu(_dot(_im2col(_zpad_rows(f1, 2, 2), 5), g("d_w2")) + g("d_b2"))  # (Ta, 16)
    f3 = _dot(_im2col(_zpad_rows(f2, 1, 1), 3), g("d_w3")) + g("d_b3")          # (Ta, 8), lane 0

    out_ref[0, 0] = jnp.concatenate([f1, f2, f3], axis=-1)             # (Ta, 32) packed


# ------------------------------ parameters ---------------------------------
def _dense(key, fi, fo):
    return jax.random.normal(key, (fi, fo), jnp.float32) * (1.0 / math.sqrt(fi))


def _convw(key, k, ci, co):
    return jax.random.normal(key, (k, ci, co), jnp.float32) * (1.0 / math.sqrt(k * ci))


def init_params(key):
    ks = iter(jax.random.split(key, 64))
    p = {}
    # FastSpeech2
    p["emb"] = jax.random.normal(next(ks), (VOCAB, HID), jnp.float32) * 0.1
    p["spk_emb"] = jax.random.normal(next(ks), (N_SPK, HID), jnp.float32) * 0.1
    p["enc_w1"], p["enc_b1"] = _dense(next(ks), HID, FFN), jnp.zeros((FFN,))
    p["enc_w2"], p["enc_b2"] = _dense(next(ks), FFN, HID), jnp.zeros((HID,))
    p["dur_w"], p["dur_b"] = _dense(next(ks), HID, 1), jnp.zeros((1,))
    p["f0_w"], p["f0_b"] = _dense(next(ks), HID, 1), jnp.zeros((1,))
    p["energy_w"], p["energy_b"] = _dense(next(ks), HID, 1), jnp.zeros((1,))
    p["f0_emb_w"], p["f0_emb_b"] = _dense(next(ks), 1, HID), jnp.zeros((HID,))
    p["energy_emb_w"], p["energy_emb_b"] = _dense(next(ks), 1, HID), jnp.zeros((HID,))
    p["dec_w1"], p["dec_b1"] = _dense(next(ks), HID, FFN), jnp.zeros((FFN,))
    p["dec_w2"], p["dec_b2"] = _dense(next(ks), FFN, HID), jnp.zeros((HID,))
    p["mel_w"], p["mel_b"] = _dense(next(ks), HID, N_MELS), jnp.zeros((N_MELS,))
    p["post_w1"], p["post_b1"] = _convw(next(ks), 5, N_MELS, N_MELS), jnp.zeros((N_MELS,))
    p["post_w2"], p["post_b2"] = _convw(next(ks), 5, N_MELS, N_MELS), jnp.zeros((N_MELS,))
    # HiFiGAN generator
    p["g_pre_w"], p["g_pre_b"] = _convw(next(ks), 7, N_MELS, 32), jnp.zeros((32,))
    p["g_up1_w"], p["g_up1_b"] = _convw(next(ks), 4, 32, 16), jnp.zeros((16,))
    p["g_up2_w"], p["g_up2_b"] = _convw(next(ks), 4, 16, 8), jnp.zeros((8,))
    p["g_res_w1"], p["g_res_b1"] = _convw(next(ks), 3, 8, 8), jnp.zeros((8,))
    p["g_res_w2"], p["g_res_b2"] = _convw(next(ks), 3, 8, 8), jnp.zeros((8,))
    p["g_post_w"], p["g_post_b"] = _convw(next(ks), 7, 8, 1), jnp.zeros((1,))
    # HiFiGAN discriminator
    p["d_w1"], p["d_b1"] = _convw(next(ks), 5, 1, 8), jnp.zeros((8,))
    p["d_w2"], p["d_b2"] = _convw(next(ks), 5, 8, 16), jnp.zeros((16,))
    p["d_w3"], p["d_b3"] = _convw(next(ks), 3, 16, 1), jnp.zeros((1,))
    return p


# ------------------------- one-time weight derivation -----------------------
def _up1_poly(w, b):
    """zero_stuff(x,2) + K=4 'same' conv (pad_l=1, pad_r=2) as one matmul:
         out[2s]   = x[s] @ w[1] + x[s+1] @ w[3]
         out[2s+1] = x[s] @ w[0] + x[s+1] @ w[2]
       Input lanes [x[s] | x[s+1]], output lanes [even | odd]."""
    top = jnp.concatenate([w[1], w[0]], axis=1)
    bot = jnp.concatenate([w[3], w[2]], axis=1)
    return jnp.concatenate([top, bot], axis=0), jnp.concatenate([b, b])


def _up2_poly_phase(w, b):
    """Second x2 upsample consuming the phase-major [e|o] layout directly.
       Input lanes [e[s] | o[s] | e[s+1]], output lanes = 4 audio-rate phases x Cout."""
    z = jnp.zeros_like(w[0])
    e_rows = jnp.concatenate([w[1], w[0], z, z], axis=1)
    o_rows = jnp.concatenate([w[3], w[2], w[1], w[0]], axis=1)
    n_rows = jnp.concatenate([z, z, w[3], w[2]], axis=1)
    return jnp.concatenate([e_rows, o_rows, n_rows], axis=0), jnp.tile(b, 4)


def _phase_same_conv_w(w, P):
    """'same' 1-D conv (odd K) as one matmul over the phase-major layout.
       Input lanes [prev row | cur row | next row] (3*P*Cin), output lanes P*Cout."""
    K, Cin, Cout = w.shape
    pad = (K - 1) // 2
    M = jnp.zeros((3 * P * Cin, P * Cout), jnp.float32)
    for p in range(P):
        for k in range(K):
            off = p - pad + k                       # sample offset relative to P*s
            row_blk, q = off // P, off % P          # neighbour row / phase of the tap
            r0 = (row_blk + 1) * P * Cin + q * Cin
            M = M.at[r0:r0 + Cin, p * Cout:(p + 1) * Cout].set(w[k])
    return M


def _pack_slab(entries):
    """Pack weights/biases into one bf16 slab (8-row aligned) + static offset table."""
    mats = [(n, m if m.ndim == 2 else m.reshape(1, -1)) for n, m in entries]
    lanes = max(m.shape[1] for _, m in mats)
    offs, blocks, r = {}, [], 0
    for name, m in mats:
        h, w = m.shape
        hp = h + ((-h) % 8)
        blocks.append(jnp.pad(m, ((0, hp - h), (0, lanes - w))))
        offs[name] = (r, h, w)
        r += hp
    return jnp.concatenate(blocks, axis=0).astype(jnp.bfloat16), offs


def derive_params(p):
    dp = {}
    # --- encoder slab (fused width-1 heads ordered [f0 | energy | dur]) ---
    hw = jnp.pad(jnp.concatenate([p["f0_w"], p["energy_w"], p["dur_w"]], axis=1),
                 ((0, 0), (0, HEADS_PAD - HEADS)))
    hb = jnp.pad(jnp.concatenate([p["f0_b"], p["energy_b"], p["dur_b"]]),
                 (0, HEADS_PAD - HEADS))
    dp["enc_slab"], dp["enc_offs"] = _pack_slab([
        ("enc_w1", p["enc_w1"]), ("enc_b1", p["enc_b1"]),
        ("enc_w2", p["enc_w2"]), ("enc_b2", p["enc_b2"]),
        ("heads_w", hw), ("heads_b", hb)])

    # --- fused decoder + postnet + vocoder-generator slab ---
    ve_w = jnp.pad(jnp.concatenate([p["f0_emb_w"], p["energy_emb_w"]], axis=0),
                   ((0, VAR_PAD - 2), (0, 0)))
    ve_b = p["f0_emb_b"] + p["energy_emb_b"]
    up1_w, up1_b = _up1_poly(p["g_up1_w"], p["g_up1_b"])
    up2_w, up2_b = _up2_poly_phase(p["g_up2_w"], p["g_up2_b"])
    dp["synth_slab"], dp["synth_offs"] = _pack_slab([
        ("ve_w", ve_w), ("ve_b", ve_b),
        ("dec_w1", p["dec_w1"]), ("dec_b1", p["dec_b1"]),
        ("dec_w2", p["dec_w2"]), ("dec_b2", p["dec_b2"]),
        ("mel_w", p["mel_w"]), ("mel_b", p["mel_b"]),
        ("post_w1", p["post_w1"].reshape(5 * N_MELS, N_MELS)), ("post_b1", p["post_b1"]),
        ("post_w2", p["post_w2"].reshape(5 * N_MELS, N_MELS)), ("post_b2", p["post_b2"]),
        ("g_pre_w", p["g_pre_w"].reshape(7 * N_MELS, 32)), ("g_pre_b", p["g_pre_b"]),
        ("up1_w", up1_w), ("up1_b", up1_b),
        ("up2_w", up2_w), ("up2_b", up2_b),
        ("res_w1", _phase_same_conv_w(p["g_res_w1"], PHASES)),
        ("res_b1", jnp.tile(p["g_res_b1"], PHASES)),
        ("res_w2", _phase_same_conv_w(p["g_res_w2"], PHASES)),
        ("res_b2", jnp.tile(p["g_res_b2"], PHASES)),
        ("g_post_w", _phase_same_conv_w(p["g_post_w"], PHASES)),
        ("g_post_b", jnp.tile(p["g_post_b"], PHASES))])

    # --- discriminator slab (final 1-ch conv as an MXU dot against a lane-padded weight) ---
    dp["disc_slab"], dp["disc_offs"] = _pack_slab([
        ("d_w1", p["d_w1"].reshape(5, 8)), ("d_b1", p["d_b1"]),
        ("d_w2", p["d_w2"].reshape(5 * 8, 16)), ("d_b2", p["d_b2"]),
        ("d_w3", jnp.pad(p["d_w3"].reshape(3 * 16, 1), ((0, 0), (0, 7)))),
        ("d_b3", jnp.pad(p["d_b3"], (0, 7)))])
    return dp


# ------------------------------ stage wrappers ------------------------------
def encoder_stage(dp, x):
    B, Tph, H = x.shape
    slab = dp["enc_slab"]
    return pl.pallas_call(
        functools.partial(_encoder_kernel, offs=dp["enc_offs"]),
        out_shape=jax.ShapeDtypeStruct((B, Tph, H + HEADS_PAD), jnp.float32),
        grid=(B,),
        in_specs=[pl.BlockSpec((1, Tph, H), lambda b: (b, 0, 0)),
                  pl.BlockSpec(slab.shape, lambda b: (0, 0))],
        out_specs=pl.BlockSpec((1, Tph, H + HEADS_PAD), lambda b: (b, 0, 0)),
        compiler_params=pltpu.CompilerParams(dimension_semantics=("parallel",)),
    )(x, slab)


def synth_stage(dp, rep, var):
    """Fused decoder + postnet + HiFiGAN generator -> (mel_before, mel_after, audio_phases)."""
    B, Tm, W = rep.shape
    slab = dp["synth_slab"]
    return pl.pallas_call(
        functools.partial(_synth_kernel, offs=dp["synth_offs"]),
        out_shape=(jax.ShapeDtypeStruct((B, Tm, N_MELS), jnp.float32),
                   jax.ShapeDtypeStruct((B, Tm, N_MELS), jnp.float32),
                   jax.ShapeDtypeStruct((B, Tm, PHASES), jnp.float32)),
        grid=(B,),
        in_specs=[pl.BlockSpec((1, Tm, W), lambda b: (b, 0, 0)),
                  pl.BlockSpec((1, Tm, 2), lambda b: (b, 0, 0)),
                  pl.BlockSpec(slab.shape, lambda b: (0, 0))],
        out_specs=(pl.BlockSpec((1, Tm, N_MELS), lambda b: (b, 0, 0)),
                   pl.BlockSpec((1, Tm, N_MELS), lambda b: (b, 0, 0)),
                   pl.BlockSpec((1, Tm, PHASES), lambda b: (b, 0, 0))),
        compiler_params=pltpu.CompilerParams(dimension_semantics=("parallel",)),
    )(rep, var, slab)


def discriminator_stage(dp, audio_pred_nlc, audio_gt_nlc=None):
    """audio_*_nlc: [B, Taudio, 1].  Returns (pred_features, gt_features_or_None),
       each a list [f1 (B,Ta,8), f2 (B,Ta,16), out (B,Ta,1)]."""
    B, Ta, _ = audio_pred_nlc.shape
    n_src = 1 if audio_gt_nlc is None else 2
    gt = audio_pred_nlc if audio_gt_nlc is None else audio_gt_nlc
    slab = dp["disc_slab"]
    packed = pl.pallas_call(
        functools.partial(_disc_kernel, offs=dp["disc_offs"]),
        out_shape=jax.ShapeDtypeStruct((n_src, B, Ta, 32), jnp.float32),
        grid=(n_src, B),
        in_specs=[pl.BlockSpec((1, Ta, 1), lambda s, b: (b, 0, 0)),
                  pl.BlockSpec((1, Ta, 1), lambda s, b: (b, 0, 0)),
                  pl.BlockSpec(slab.shape, lambda s, b: (0, 0))],
        out_specs=pl.BlockSpec((1, 1, Ta, 32), lambda s, b: (s, b, 0, 0)),
        compiler_params=pltpu.CompilerParams(
            dimension_semantics=("parallel", "parallel")),
    )(audio_pred_nlc, gt, slab)

    def unpack(sl):
        return [sl[..., 0:8], sl[..., 8:24], sl[..., 24:25]]

    pred_feats = unpack(packed[0])
    true_feats = unpack(packed[1]) if n_src == 2 else None
    return pred_feats, true_feats


# -------------------------------- JointTTS -----------------------------------
def joint_tts_forward(params, phoneme_ids, spk_id, audio_gt=None, duration_gt=None,
                      f0_gt=None, energy_gt=None, mel_length=None,
                      f0_length=None, energy_length=None, derived=None):
    dp = derived if derived is not None else derive_params(params)

    # ---- FastSpeech2 front end: embedding lookup (gather) stays in XLA ----
    x = jnp.take(params["emb"], phoneme_ids, axis=0) \
        + jnp.take(params["spk_emb"], spk_id, axis=0)[:, None, :]      # [B, Tph, H]
    enc = encoder_stage(dp, x)                       # [B, Tph, H+8] = [enc | f0 | energy | dur | pad]
    duration_predict = enc[..., HID + 2]             # [B, Tph]

    if duration_gt is not None:
        dur = duration_gt
    else:
        dur = jnp.clip(jnp.round(jnp.exp(jnp.clip(duration_predict, -10.0, 10.0))),
                       1, mel_length).astype(jnp.int32)

    # Length regulator (data-dependent gather, XLA).  The per-phoneme f0/energy head
    # outputs ride along inside the 40-lane encoder output (== applying heads post-expansion).
    rep = jax.vmap(
        lambda xb, db: jnp.repeat(xb, db, axis=0, total_repeat_length=mel_length)
    )(enc, dur)                                                        # [B, Tmel, H+8]
    f0_predict = rep[..., HID]
    energy_predict = rep[..., HID + 1]

    if f0_gt is None and energy_gt is None:
        var = rep[..., HID:HID + 2]
    else:
        f0_used = f0_gt if f0_gt is not None else f0_predict
        energy_used = energy_gt if energy_gt is not None else energy_predict
        var = jnp.stack([f0_used, energy_used], axis=-1)               # [B, Tmel, 2]

    # ---- fused decoder + postnet + HiFiGAN generator ----
    mel_before, mel_after, audio_pm = synth_stage(dp, rep, var)        # audio_pm: [B, Tmel, 4]
    B, Tm, _ = audio_pm.shape
    Ta = Tm * PHASES
    audio_pred = audio_pm.reshape(B, 1, Ta)                            # [B, 1, Taudio] (no copy)

    # ---- HiFiGAN discriminator: predicted + ground-truth batched over one grid axis ----
    gt_nlc = None if audio_gt is None else audio_gt.astype(jnp.float32).reshape(B, -1, 1)
    discriminator_outputs, true_features = discriminator_stage(
        dp, audio_pm.reshape(B, Ta, 1), gt_nlc)

    return (audio_pred, mel_after, mel_before, f0_predict, energy_predict, duration_predict,
            discriminator_outputs, true_features)


# ---------------------------------- main -------------------------------------
if __name__ == "__main__":
    key = jax.random.PRNGKey(0)
    k_par, k_ph, k_f0, k_en, k_au = jax.random.split(key, 5)

    params = init_params(k_par)
    dparams = derive_params(params)

    B, T_PH = 2, 8
    T_MEL = 16                       # each phoneme expanded to 2 frames
    T_AUDIO = T_MEL * UPSAMPLE       # 64

    phoneme_ids = jax.random.randint(k_ph, (B, T_PH), 0, VOCAB, dtype=jnp.int32)
    spk_id = jnp.array([0, 1], dtype=jnp.int32)
    duration_gt = jnp.full((B, T_PH), 2, dtype=jnp.int32)
    f0_gt = jax.random.uniform(k_f0, (B, T_MEL), jnp.float32, 0.0, 1.0)
    energy_gt = jax.random.uniform(k_en, (B, T_MEL), jnp.float32, 0.0, 1.0)
    audio_gt = jax.random.normal(k_au, (B, 1, T_AUDIO), jnp.float32)

    outputs = joint_tts_forward(
        params, phoneme_ids, spk_id,
        audio_gt=audio_gt, duration_gt=duration_gt,
        f0_gt=f0_gt, energy_gt=energy_gt,
        mel_length=T_MEL, f0_length=T_MEL, energy_length=T_MEL,
        derived=dparams)

    jax.tree_util.tree_map(lambda a: jax.block_until_ready(a), outputs)
    print("KERNEL_OK")
</pallas_src>

<mosaic_0001>
module attributes {stable_mosaic.version = 11 : i64} {
  func.func @_encoder_kernel(%arg0: i32, %arg1: memref<1x8x32xf32, #tpu.memory_space<vmem>>, %arg2: memref<152x64xbf16, #tpu.memory_space<vmem>>, %arg3: memref<1x8x40xf32, #tpu.memory_space<vmem>>) attributes {dimension_semantics = [#tpu.dimension_semantics<parallel>], iteration_bounds = array<i64: 2>, scalar_prefetch = 0 : i64, scratch_operands = 0 : i64, tpu.core_type = #tpu.core_type<tc>, window_params = [{transform_indices = @transform_0, window_bounds = array<i64: 1, 8, 32>}, {pipeline_mode = #tpu.pipeline_mode<synchronous>, transform_indices = @transform_1, window_bounds = array<i64: 152, 64>}, {transform_indices = @transform_2, window_bounds = array<i64: 1, 8, 40>}]} {
    %c0 = arith.constant 0 : index
    %c0_0 = arith.constant 0 : index
    %c0_1 = arith.constant 0 : index
    %0 = vector.load %arg1[%c0, %c0_0, %c0_1] : memref<1x8x32xf32, #tpu.memory_space<vmem>>, vector<1x8x32xf32>
    %1 = vector.shape_cast %0 : vector<1x8x32xf32> to vector<8x32xf32>
    %c0_2 = arith.constant 0 : index
    %c0_3 = arith.constant 0 : index
    %2 = vector.load %arg2[%c0_2, %c0_3] : memref<152x64xbf16, #tpu.memory_space<vmem>>, vector<32x64xbf16>
    %3 = arith.truncf %1 : vector<8x32xf32> to vector<8x32xbf16>
    %cst = arith.constant dense<0.000000e+00> : vector<8x64xf32>
    %4 = tpu.matmul %3, %2, %cst {dimension_numbers = #tpu.dot_dimension_numbers<[1], [0], [0], [1], [0, 0, 1, 1], [], []>} : vector<8x32xbf16>, vector<32x64xbf16>, vector<8x64xf32> -> vector<8x64xf32>
    %c32 = arith.constant 32 : index
    %c0_4 = arith.constant 0 : index
    %5 = vector.load %arg2[%c32, %c0_4] : memref<152x64xbf16, #tpu.memory_space<vmem>>, vector<1x64xbf16>
    %6 = arith.extf %5 : vector<1x64xbf16> to vector<1x64xf32>
    %7 = vector.broadcast %6 : vector<1x64xf32> to vector<8x64xf32>
    %8 = arith.addf %4, %7 : vector<8x64xf32>
    %cst_5 = arith.constant 0.000000e+00 : f32
    %9 = vector.broadcast %cst_5 : f32 to vector<8x64xf32>
    %10 = arith.maximumf %8, %9 : vector<8x64xf32>
    %c40 = arith.constant 40 : index
    %c0_6 = arith.constant 0 : index
    %11 = vector.load %arg2[%c40, %c0_6] : memref<152x64xbf16, #tpu.memory_space<vmem>>, vector<64x32xbf16>
    %12 = arith.truncf %10 : vector<8x64xf32> to vector<8x64xbf16>
    %cst_7 = arith.constant dense<0.000000e+00> : vector<8x32xf32>
    %13 = tpu.matmul %12, %11, %cst_7 {dimension_numbers = #tpu.dot_dimension_numbers<[1], [0], [0], [1], [0, 0, 1, 1], [], []>} : vector<8x64xbf16>, vector<64x32xbf16>, vector<8x32xf32> -> vector<8x32xf32>
    %c104 = arith.constant 104 : index
    %c0_8 = arith.constant 0 : index
    %14 = vector.load %arg2[%c104, %c0_8] : memref<152x64xbf16, #tpu.memory_space<vmem>>, vector<1x32xbf16>
    %15 = arith.extf %14 : vector<1x32xbf16> to vector<1x32xf32>
    %16 = vector.broadcast %15 : vector<1x32xf32> to vector<8x32xf32>
    %17 = arith.addf %13, %16 : vector<8x32xf32>
    %18 = arith.addf %17, %1 : vector<8x32xf32>
    %c112 = arith.constant 112 : index
    %c0_9 = arith.constant 0 : index
    %19 = vector.load %arg2[%c112, %c0_9] : memref<152x64xbf16, #tpu.memory_space<vmem>>, vector<32x8xbf16>
    %20 = arith.truncf %18 : vector<8x32xf32> to vector<8x32xbf16>
    %cst_10 = arith.constant dense<0.000000e+00> : vector<8x8xf32>
    %21 = tpu.matmul %20, %19, %cst_10 {dimension_numbers = #tpu.dot_dimension_numbers<[1], [0], [0], [1], [0, 0, 1, 1], [], []>} : vector<8x32xbf16>, vector<32x8xbf16>, vector<8x8xf32> -> vector<8x8xf32>
    %c144 = arith.constant 144 : index
    %c0_11 = arith.constant 0 : index
    %22 = vector.load %arg2[%c144, %c0_11] : memref<152x64xbf16, #tpu.memory_space<vmem>>, vector<1x8xbf16>
    %23 = arith.extf %22 : vector<1x8xbf16> to vector<1x8xf32>
    %24 = vector.broadcast %23 : vector<1x8xf32> to vector<8x8xf32>
    %25 = arith.addf %21, %24 : vector<8x8xf32>
    %26 = tpu.concatenate %18, %25 in 1 : vector<8x32xf32>, vector<8x8xf32> -> vector<8x40xf32>
    %c0_12 = arith.constant 0 : index
    %c0_13 = arith.constant 0 : index
    %c0_14 = arith.constant 0 : index
    %27 = vector.load %arg3[%c0_12, %c0_13, %c0_14] : memref<1x8x40xf32, #tpu.memory_space<vmem>>, vector<1x8x40xf32>
    %28 = vector.shape_cast %27 : vector<1x8x40xf32> to vector<8x40xf32>
    %29 = vector.shape_cast %26 : vector<8x40xf32> to vector<1x8x40xf32>
    tpu.vector_store %arg3[%c0_12, %c0_13, %c0_14], %29 {strides = array<i32>} : memref<1x8x40xf32, #tpu.memory_space<vmem>>, vector<1x8x40xf32>,
    return
  }
  func.func @transform_0(%arg0: i32) -> (i32, i32, i32) {
    %c0_i32 = arith.constant 0 : i32
    %c0_i32_0 = arith.constant 0 : i32
    %c0_i32_1 = arith.constant 0 : i32
    return %arg0, %c0_i32, %c0_i32_0 : i32, i32, i32
  }
  func.func @transform_1(%arg0: i32) -> (i32, i32) {
    %c0_i32 = arith.constant 0 : i32
    %c0_i32_0 = arith.constant 0 : i32
    %c0_i32_1 = arith.constant 0 : i32
    return %c0_i32, %c0_i32_0 : i32, i32
  }
  func.func @transform_2(%arg0: i32) -> (i32, i32, i32) {
    %c0_i32 = arith.constant 0 : i32
    %c0_i32_0 = arith.constant 0 : i32
    %c0_i32_1 = arith.constant 0 : i32
    return %arg0, %c0_i32, %c0_i32_0 : i32, i32, i32
  }
}

</mosaic_0001>

<llo_original>
// kernel: tpu_custom_call.1
$region0: #{tpu_custom_call.1}
  #allocation0 [shape = 'u32[]', space=smem, size = 0x4, offset = 0x4, fixed_abs, tag = 'smem constant byte address 0x4 - core index']
  #allocation1 [shape = 'u32[72,128]{1,0:T(1,128)}', space=vmem, size = 0x9000, scoped, tag = 'internal scratch']
  %s0 = inlined_call_operand.vmem [shape: f32[2,8,32], index: 0, kind: input, shape index: {}]
  %s1 = inlined_call_operand.vmem [shape: bf16[152,64], index: 1, kind: input, shape index: {}]
  %s2 = inlined_call_operand.hbm [shape: f32[2,8,40], index: 2, kind: output, shape index: {}]
  %s3 = sld [smem:[#allocation0]]
  $region41: #{tpu_custom_call.1} parent=0
    _
  %s5 = ssub.s32 1, %s3
  %s6 = scalar_select 0, %s5, %s3
  $region1: #{tpu_custom_call.1} parent=0
    #allocation2 [shape = 'u8[8192]{0}', space=vmem, size = 0x2000, scoped, tag = 'output window, operand 0']
    #allocation3 [shape = 's32[2]{0}', space=sflag, size = 0x8, scoped, tag = 'scoped memory for tpu_custom_call.1']
    %7 = vsyncpa [#allocation3], 0
    %s8 = scalar_lea.sflag [#allocation3], 1
    %9 = vsyncpa %s8, 0
    loop: start=0, step=1, limit=4
    $region2: #{tpu_custom_call.1} parent=1 // loop_pre_header
      _
    $region3: #{tpu_custom_call.1} parent=1 // loop_header
      %s11 = sphi 0, %s15
      %p12 = scmp.ge.s32.totalorder %s11, 4
      %s21 = sphi 0, %s23
      %s24 = sphi 0, %s21
      %s25 = sphi 0, %s24
      %s41 = sphi 0, %s25
      %s45 = sphi 0, %s45
      %s47 = sphi 0, %s45
      %s48 = sphi 0, %s47
      %s62 = sphi 0, %s48
      %s68 = sphi 0, %s70
      %s71 = sphi 0, %s68
      %s72 = sphi 0, %s71
      %s88 = sphi 0, %s72
    $region4: #{tpu_custom_call.1} parent=1 // loop_header_branch
      %14 = sbr.rel (%p12) target = $region8
    $region5: #{tpu_custom_call.1} parent=1 // loop_body
      %s16 = ssub.s32 %s11, 1
      %s17 = ssub.s32 %s11, 2
      %s18 = sadd.s32 %s11, 1
      %s19 = ssub.s32 %s11, %s18
      %p20 = scmp.eq.s32.totalorder %s19, 0
      %s22 = sadd.s32 %s21, 1
      %s23 = scalar_select %p20, %s21, %s22
      %p26 = pneg %p20
      %p27 = scmp.eq.s32.totalorder %s11, 1
      %p28 = por %p26, %p27
      %p29 = scmp.ne.s32.totalorder %s21, %s24
      %p30 = scmp.eq.s32.totalorder %s11, 0
      %p31 = por %p29, %p30
      %p32 = scmp.ne.s32.totalorder %s21, %s24
      %p33 = scmp.eq.s32.totalorder %s16, 1
      %p34 = por %p32, %p33
      %p35 = scmp.ne.s32.totalorder %s24, %s25
      %p36 = scmp.eq.s32.totalorder %s16, 0
      %p37 = por %p35, %p36
      %p38 = scmp.ne.s32.totalorder %s24, %s25
      %p39 = scmp.eq.s32.totalorder %s17, 1
      %p40 = por %p38, %p39
      %p42 = scmp.ne.s32.totalorder %s25, %s41
      %p43 = scmp.eq.s32.totalorder %s17, 0
      %p44 = por %p42, %p43
      %s46 = sadd.s32 %s45, 1
      %p49 = scmp.eq.s32.totalorder %s11, 1
      %p50 = scmp.ne.s32.totalorder %s45, %s47
      %p51 = scmp.eq.s32.totalorder %s11, 0
      %p52 = por %p50, %p51
      %p53 = scmp.ne.s32.totalorder %s45, %s47
      %p54 = scmp.eq.s32.totalorder %s16, 1
      %p55 = por %p53, %p54
      %p56 = scmp.ne.s32.totalorder %s47, %s48
      %p57 = scmp.eq.s32.totalorder %s16, 0
      %p58 = por %p56, %p57
      %p59 = scmp.ne.s32.totalorder %s47, %s48
      %p60 = scmp.eq.s32.totalorder %s17, 1
      %p61 = por %p59, %p60
      %p63 = scmp.ne.s32.totalorder %s48, %s62
      %p64 = scmp.eq.s32.totalorder %s17, 0
      %p65 = por %p63, %p64
      %s66 = ssub.s32 %s11, %s18
      %p67 = scmp.eq.s32.totalorder %s66, 0
      %s69 = sadd.s32 %s68, 1
      %s70 = scalar_select %p67, %s68, %s69
      %p73 = pneg %p67
      %p74 = scmp.eq.s32.totalorder %s11, 1
      %p75 = por %p73, %p74
      %p76 = scmp.ne.s32.totalorder %s68, %s71
      %p77 = scmp.eq.s32.totalorder %s11, 0
      %p78 = por %p76, %p77
      %p79 = scmp.ne.s32.totalorder %s68, %s71
      %p80 = scmp.eq.s32.totalorder %s16, 1
      %p81 = por %p79, %p80
      %p82 = scmp.ne.s32.totalorder %s71, %s72
      %p83 = scmp.eq.s32.totalorder %s16, 0
      %p84 = por %p82, %p83
      %p85 = scmp.ne.s32.totalorder %s71, %s72
      %p86 = scmp.eq.s32.totalorder %s17, 1
      %p87 = por %p85, %p86
      %p89 = scmp.ne.s32.totalorder %s72, %s88
      %p90 = scmp.eq.s32.totalorder %s17, 0
      %p91 = por %p89, %p90
      %p92 = scmp.le.s32.totalorder 1, %s11
      %p93 = scmp.lt.s32.totalorder %s11, 3
      %p94 = pnand %p92, %p93
      %p95 = pneg %p94
      // Predicated region
      $region9: #{tpu_custom_call.1} parent=5 // pred_check
        _
      $region10: #{tpu_custom_call.1} parent=5 // pred_check_branch
        %97 = sbr.rel (%p94) target = $region12
      $region11: #{tpu_custom_call.1} parent=5 // pred_region
        %s98 = ssub.s32 %s11, 1
        // Predicated region
        $region13: #{tpu_custom_call.1} parent=11 // pred_check
          %p99 = pneg %p58
        $region14: #{tpu_custom_call.1} parent=11 // pred_check_branch
          %101 = sbr.rel (%p99) target = $region16
        $region15: #{tpu_custom_call.1} parent=11 // pred_region
          _
        $region16: #{tpu_custom_call.1} parent=11 // pred_fallthru
          _
      $region12: #{tpu_custom_call.1} parent=5 // pred_fallthru
        _
      %p102 = scmp.lt.s32.totalorder %s11, 2
      // Predicated region
      $region17: #{tpu_custom_call.1} parent=5 // pred_check
        %p103 = pneg %p102
      $region18: #{tpu_custom_call.1} parent=5 // pred_check_branch
        %105 = sbr.rel (%p103) target = $region20
      $region19: #{tpu_custom_call.1} parent=5 // pred_region
        // Predicated region
        $region21: #{tpu_custom_call.1} parent=19 // pred_check
          %p106 = pneg %p31
        $region22: #{tpu_custom_call.1} parent=19 // pred_check_branch
          %108 = sbr.rel (%p106) target = $region24
        $region23: #{tpu_custom_call.1} parent=19 // pred_region
          %p109 = scmp.lt.s32.totalorder %s11, 1
          %s110 = scalar_select %p109, %s11, 1
          %s111 = smul.addr %s110, 8
          %s112 = scalar_lea.vmem %s0, %s111
        $region24: #{tpu_custom_call.1} parent=19 // pred_fallthru
          _
      $region20: #{tpu_custom_call.1} parent=5 // pred_fallthru
        _
      %p113 = scmp.le.s32.totalorder 1, %s11
      %p114 = scmp.lt.s32.totalorder %s11, 3
      %p115 = pnand %p113, %p114
      %p116 = pneg %p115
      // Predicated region
      $region25: #{tpu_custom_call.1} parent=5 // pred_check
        _
      $region26: #{tpu_custom_call.1} parent=5 // pred_check_branch
        %118 = sbr.rel (%p115) target = $region28
      $region27: #{tpu_custom_call.1} parent=5 // pred_region
        %s119 = ssub.s32 %s11, 1
        %p120 = scmp.lt.s32.totalorder %s16, 1
        %s121 = scalar_select %p120, %s16, 1
        %s122 = smul.addr %s121, 8
        %s123 = scalar_lea.vmem %s0, %s122
        %p124 = pneg %p37
        %p125 = pneg %p34
        %p126 = pneg %p58
        %p127 = pneg %p55
        %p128 = pneg %p84
        %p129 = pneg %p81
        %s130 = sand.u32 %s71, 1
        %s131 = scalar_lea.sflag [#allocation3], %s130
        %s132 = sand.u32 %s71, 1
        %s133 = smul.addr %s132, 8
        %s134 = scalar_lea.vmem [#allocation2], %s133
        %p135 = scmp.lt.s32.totalorder %s16, 1
        %s136 = scalar_select %p135, %s16, 1
        %s137 = smul.addr %s136, 8
        %s138 = scalar_lea.vmem %s0, %s137
        %v140 = vld [vmem:[%s138] sm:$0xff]
        %v141 = vld [vmem:[%s1] sm:$0xf]
        %v142 = vld [vmem:[%s1 + $0x4] sm:$0xf]
        %v143 = vld [vmem:[%s1 + $0x8] sm:$0xf]
        %v144 = vld [vmem:[%s1 + $0xc] sm:$0xf]
        %v145 = vpack.c.bf16 %v140, %v140
        %v146 = vld [vmem:[%s1 + $0x10] sm:$0x1]
        %v147 = vunpack.c.l.bf16 %v146
        %v148 = vperm.slane %v147, 0
        %v153 = vunpack.c.l.b16 %v141
        %v154 = vunpack.c.l.b16 %v142
        %v155 = vunpack.c.l.b16 %v143
        %v156 = vunpack.c.l.b16 %v144
        %v157 = vpack.c.b16 %v154, %v153
        %v158 = vpack.c.b16 %v156, %v155
        %vm161 = vcmask 261120
        %v163 = vsel %vm161, %v145, 0
        %165 = vmatpush.bf16.msra.mxu0 0
        %166 = vmatpush.bf16.msra.mxu0 0
        %167 = vmatpush.bf16.msra.mxu0 0
        %168 = vmatpush.bf16.msra.mxu0 0
        %169 = vmatpush.bf16.msra.mxu0 0
        %170 = vmatpush.bf16.msra.mxu0 0
        %171 = vmatpush.bf16.msra.mxu0 %v158
        %172 = vmatpush.bf16.msra.mxu0 %v157
        %173 = vmatmul.bf16.gmra.mxu0 %v163
        %v174 = vpop.f32.mrf.mxu0
        %v175 = vadd.f32 %v148, %v174
        %v176 = vpop.f32.mrf.mxu0
        %177 = vdwg.mxu0
        %v178 = vmax.f32 %v175, 0.0
        %v179 = vld [vmem:[%s1 + $0x14] sm:$0xf]
        %v180 = vld [vmem:[%s1 + $0x18] sm:$0xf]
        %v181 = vld [vmem:[%s1 + $0x1c] sm:$0xf]
        %v182 = vld [vmem:[%s1 + $0x20] sm:$0xf]
        %v183 = vld [vmem:[%s1 + $0x24] sm:$0xf]
        %v184 = vld [vmem:[%s1 + $0x28] sm:$0xf]
        %v185 = vld [vmem:[%s1 + $0x2c] sm:$0xf]
        %v186 = vld [vmem:[%s1 + $0x30] sm:$0xf]
        %v187 = vpack.c.bf16 %v178, %v178
        %v188 = vld [vmem:[%s1 + $0x34] sm:$0x1]
        %v189 = vunpack.c.l.bf16 %v188
        %v190 = vperm.slane %v189, 0
        %v199 = vunpack.c.l.b16 %v179
        %v200 = vunpack.c.l.b16 %v180
        %v201 = vunpack.c.l.b16 %v181
        %v202 = vunpack.c.l.b16 %v182
        %v203 = vunpack.c.l.b16 %v183
        %v204 = vunpack.c.l.b16 %v184
        %v205 = vunpack.c.l.b16 %v185
        %v206 = vunpack.c.l.b16 %v186
        %v207 = vpack.c.b16 %v200, %v199
        %v208 = vpack.c.b16 %v202, %v201
        %v209 = vpack.c.b16 %v204, %v203
        %v210 = vpack.c.b16 %v206, %v205
        %vm215 = vcmask 523264
        %v217 = vsel %vm215, %v187, 0
        %219 = vmatpush.bf16.msra.mxu0 0
        %220 = vmatpush.bf16.msra.mxu0 0
        %221 = vmatpush.bf16.msra.mxu0 0
        %222 = vmatpush.bf16.msra.mxu0 0
        %223 = vmatpush.bf16.msra.mxu0 %v210
        %224 = vmatpush.bf16.msra.mxu0 %v209
        %225 = vmatpush.bf16.msra.mxu0 %v208
        %226 = vmatpush.bf16.msra.mxu0 %v207
        %227 = vmatmul.bf16.gmra.mxu0 %v217
        %v228 = vpop.f32.mrf.mxu0
        %v229 = vadd.f32 %v190, %v228
        %v230 = vpop.f32.mrf.mxu0
        %231 = vdwg.mxu0
        %v232 = vadd.f32 %v229, %v140
        %v233 = vld [vmem:[%s1 + $0x38] sm:$0xf]
        %v234 = vld [vmem:[%s1 + $0x3c] sm:$0xf]
        %v235 = vld [vmem:[%s1 + $0x40] sm:$0xf]
        %v236 = vld [vmem:[%s1 + $0x44] sm:$0xf]
        %v237 = vpack.c.bf16 %v232, %v232
        %v238 = vld [vmem:[%s1 + $0x48] sm:$0x1]
        %v239 = vunpack.c.l.bf16 %v238
        %v240 = vperm.slane %v239, 0
        %v245 = vunpack.c.l.b16 %v233
        %v246 = vunpack.c.l.b16 %v234
        %v247 = vunpack.c.l.b16 %v235
        %v248 = vunpack.c.l.b16 %v236
        %v249 = vpack.c.b16 %v246, %v245
        %v250 = vpack.c.b16 %v248, %v247
        %v254 = vsel %vm161, %v237, 0
        %256 = vmatpush.bf16.msra.mxu0 0
        %257 = vmatpush.bf16.msra.mxu0 0
        %258 = vmatpush.bf16.msra.mxu0 0
        %259 = vmatpush.bf16.msra.mxu0 0
        %260 = vmatpush.bf16.msra.mxu0 0
        %261 = vmatpush.bf16.msra.mxu0 0
        %262 = vmatpush.bf16.msra.mxu0 %v250
        %263 = vmatpush.bf16.msra.mxu0 %v249
        %264 = vmatmul.bf16.gmra.mxu0 %v254
        %v265 = vpop.f32.mrf.mxu0
        %v266 = vadd.f32 %v240, %v265
        %v267 = vpop.f32.mrf.mxu0
        %268 = vdwg.mxu0
        %270 = vrot.lane.b32.xlu0 %v266, 32
        %v271 = vpop.permute.xlu0 %270
        %v273 = vsel %vm161, %v232, %v271
        %vm274 = vcmask 326656
        %275 = vst.msk [vmem:[%s134] sm:$0xff] %vm274, %v273
        %s276 = sand.u32 %s71, 1
        %s277 = scalar_lea.sflag [#allocation3], %s276
        %s278 = sand.u32 %s71, 1
        %s279 = smul.addr %s278, 8
        %s280 = scalar_lea.vmem [#allocation2], %s279
        // Predicated region
        $region29: #{tpu_custom_call.1} parent=27 // pred_check
          %p281 = pneg %p81
        $region30: #{tpu_custom_call.1} parent=27 // pred_check_branch
          %283 = sbr.rel (%p281) target = $region32
        $region31: #{tpu_custom_call.1} parent=27 // pred_region
          %285 = vsyncadd %s277, 0
          %s286 = smul.addr %s16, 8
          %s287 = scalar_lea.hbm %s2, %s286
          %s289 = sshll.u32 %s280, 4
          %s290 = int_to_ptr.vmem [resolvable:$true] %s289
          %s291 = sshll.u32 %s287, 4
          %s292 = int_to_ptr.hbm [resolvable:$true] %s291
          %294 = dma.vmem_to_hbm [thread:$0]  %s290, 128, %s292, %s277
        $region32: #{tpu_custom_call.1} parent=27 // pred_fallthru
          _
      $region28: #{tpu_custom_call.1} parent=5 // pred_fallthru
        _
      %p295 = scmp.le.s32.totalorder 2, %s11
      // Predicated region
      $region33: #{tpu_custom_call.1} parent=5 // pred_check
        %p296 = pneg %p295
      $region34: #{tpu_custom_call.1} parent=5 // pred_check_branch
        %298 = sbr.rel (%p296) target = $region36
      $region35: #{tpu_custom_call.1} parent=5 // pred_region
        %s299 = ssub.s32 %s11, 2
        // Predicated region
        $region37: #{tpu_custom_call.1} parent=35 // pred_check
          %p300 = pneg %p87
        $region38: #{tpu_custom_call.1} parent=35 // pred_check_branch
          %302 = sbr.rel (%p300) target = $region40
        $region39: #{tpu_custom_call.1} parent=35 // pred_region
          %s303 = sand.u32 %s72, 1
          %s304 = scalar_lea.sflag [#allocation3], %s303
          %s305 = sand.u32 %s72, 1
          %s306 = smul.addr %s305, 8
          %s307 = scalar_lea.vmem [#allocation2], %s306
          %309 = dma.done %s304, 128
        $region40: #{tpu_custom_call.1} parent=35 // pred_fallthru
          _
      $region36: #{tpu_custom_call.1} parent=5 // pred_fallthru
        _
    $region6: #{tpu_custom_call.1} parent=1 // loop_footer
      %s15 = sadd.s32 1, %s11
    $region7: #{tpu_custom_call.1} parent=1 // loop_footer_branch
      %10 = sbr.rel target = $region3
    $region8: #{tpu_custom_call.1} parent=1 // loop_exit
      _
    %310 = vsyncpa [#allocation3], 1
    %s311 = scalar_lea.sflag [#allocation3], 1
    %312 = vsyncpa %s311, 1

</llo_original>
